<compile_context>
chip_gen: v7x
topology: tpu7x:2x2x1
jax: 0.10.0
libtpu: 0.0.40
codegen_flags: <defaults>
</compile_context>

<pallas_src>
import jax
import jax.numpy as jnp
from jax.experimental import pallas as pl
from jax.experimental.pallas import tpu as pltpu


def _qcu_sigmoid_kernel(dep_ref, x_ref, bias_ref, out_ref):
    # Elementwise hot path: x * sigmoid(dep) + bias.
    # bias_ref is either (tr, 1) or (1, tc); both broadcast against (tr, tc).
    out_ref[...] = x_ref[...] * jax.nn.sigmoid(dep_ref[...]) + bias_ref[...]


def _pick_tiles(rows, cols):
    """Pick (tr, tc) respecting the (8, 128) rule with a bounded VMEM budget."""
    LANE_TARGET = 2048                       # lanes per tile (multiple of 128)
    TILE_ELEMS = (2 * 1024 * 1024) // 4      # ~2 MiB per f32 tile per operand

    if cols % 128 == 0:
        tc = min(cols, LANE_TARGET)
    else:
        # Odd/small lane extent: full-extent block is the only legal choice.
        tc = cols

    # Row tile: multiple of 8, sized so tr*tc stays under the per-tile budget.
    budget_rows = max(8, (TILE_ELEMS // max(tc, 1)) // 8 * 8)
    if rows < 8:
        tr = rows                            # full extent (legal)
    elif rows % 8 == 0:
        tr = min(rows, budget_rows)
    else:
        tr = min(budget_rows, (rows // 8) * 8)
        tr = max(tr, 8)                      # ragged last block handled by cdiv
    return tr, tc


def quadratic_connection_unit_sigmoid(dep, x, bias):
    """dep, x: (N, C, H, W) float32; bias: (1, C, 1, 1) float32."""
    N, C, H, W = x.shape
    hw = H * W

    if hw % 128 == 0:
        # Layout A: (N*C, H*W) slab, bias as a per-row column.
        rows, cols = N * C, hw
        dep2 = dep.reshape(rows, cols)
        x2 = x.reshape(rows, cols)
        bias2 = jnp.broadcast_to(bias.reshape(1, C), (N, C)).reshape(rows, 1)
        per_row_bias = True
    else:
        # Layout B: lane-dense (N, C*H*W) slab, bias as a per-column row.
        rows, cols = N, C * hw
        dep2 = dep.reshape(rows, cols)
        x2 = x.reshape(rows, cols)
        bias2 = jnp.repeat(bias.reshape(C), hw).reshape(1, cols)
        per_row_bias = False

    tr, tc = _pick_tiles(rows, cols)
    grid = (pl.cdiv(rows, tr), pl.cdiv(cols, tc))   # j (lanes) innermost

    if per_row_bias:
        bias_spec = pl.BlockSpec((tr, 1), lambda i, j: (i, 0))
    else:
        bias_spec = pl.BlockSpec((1, tc), lambda i, j: (0, j))

    elems = rows * cols
    out2 = pl.pallas_call(
        _qcu_sigmoid_kernel,
        out_shape=jax.ShapeDtypeStruct((rows, cols), x.dtype),
        grid=grid,
        in_specs=[
            pl.BlockSpec((tr, tc), lambda i, j: (i, j)),   # dep
            pl.BlockSpec((tr, tc), lambda i, j: (i, j)),   # x
            bias_spec,                                     # bias
        ],
        out_specs=pl.BlockSpec((tr, tc), lambda i, j: (i, j)),
        compiler_params=pltpu.CompilerParams(
            dimension_semantics=("parallel", "parallel"),
            vmem_limit_bytes=32 * 1024 * 1024,
        ),
        cost_estimate=pl.CostEstimate(
            flops=2 * elems,                   # mul + add per element
            transcendentals=elems,             # exp inside sigmoid
            bytes_accessed=3 * elems * 4 + bias2.size * 4,
        ),
    )(dep2, x2, bias2)

    return out2.reshape(N, C, H, W)


if __name__ == "__main__":
    key = jax.random.PRNGKey(0)
    k_dep, k_x, k_bias = jax.random.split(key, 3)

    N, C, H, W = 2, 4, 16, 16
    dep = jax.random.normal(k_dep, (N, C, H, W), dtype=jnp.float32)
    x = jax.random.normal(k_x, (N, C, H, W), dtype=jnp.float32)
    # Deterministic stand-in for torch.randn((1, channels, 1, 1))
    bias = jax.random.normal(k_bias, (1, C, 1, 1), dtype=jnp.float32)

    out = quadratic_connection_unit_sigmoid(dep, x, bias)
    out = jax.block_until_ready(out)

    # Reference check in plain JAX (same semantics as the PyTorch module).
    ref = x * jax.nn.sigmoid(dep) + bias
    assert out.shape == (N, C, H, W)
    assert jnp.allclose(out, ref, atol=1e-6, rtol=1e-6)

    print("KERNEL_OK")
</pallas_src>

<mosaic_0001>
module attributes {stable_mosaic.version = 11 : i64} {
  func.func @_qcu_sigmoid_kernel(%arg0: i32, %arg1: i32, %arg2: memref<8x256xf32, #tpu.memory_space<vmem>>, %arg3: memref<8x256xf32, #tpu.memory_space<vmem>>, %arg4: memref<8x1xf32, #tpu.memory_space<vmem>>, %arg5: memref<8x256xf32, #tpu.memory_space<vmem>>) attributes {dimension_semantics = [#tpu.dimension_semantics<parallel>, #tpu.dimension_semantics<parallel>], iteration_bounds = array<i64: 1, 1>, scalar_prefetch = 0 : i64, scratch_operands = 0 : i64, tpu.core_type = #tpu.core_type<tc>, window_params = [{transform_indices = @transform_0, window_bounds = array<i64: 8, 256>}, {transform_indices = @transform_1, window_bounds = array<i64: 8, 256>}, {transform_indices = @transform_2, window_bounds = array<i64: 8, 1>}, {transform_indices = @transform_3, window_bounds = array<i64: 8, 256>}]} {
    %c0 = arith.constant 0 : index
    %c0_0 = arith.constant 0 : index
    %0 = vector.load %arg3[%c0, %c0_0] : memref<8x256xf32, #tpu.memory_space<vmem>>, vector<8x256xf32>
    %c0_1 = arith.constant 0 : index
    %c0_2 = arith.constant 0 : index
    %1 = vector.load %arg2[%c0_1, %c0_2] : memref<8x256xf32, #tpu.memory_space<vmem>>, vector<8x256xf32>
    %2 = arith.negf %1 : vector<8x256xf32>
    %3 = math.exp %2 : vector<8x256xf32>
    %cst = arith.constant 1.000000e+00 : f32
    %4 = vector.broadcast %cst : f32 to vector<8x256xf32>
    %5 = arith.addf %4, %3 : vector<8x256xf32>
    %6 = arith.divf %4, %5 : vector<8x256xf32>
    %7 = arith.mulf %0, %6 : vector<8x256xf32>
    %c0_3 = arith.constant 0 : index
    %c0_4 = arith.constant 0 : index
    %8 = vector.load %arg4[%c0_3, %c0_4] : memref<8x1xf32, #tpu.memory_space<vmem>>, vector<8x1xf32>
    %9 = vector.broadcast %8 : vector<8x1xf32> to vector<8x256xf32>
    %10 = arith.addf %7, %9 : vector<8x256xf32>
    %c0_5 = arith.constant 0 : index
    %c0_6 = arith.constant 0 : index
    %11 = vector.load %arg5[%c0_5, %c0_6] : memref<8x256xf32, #tpu.memory_space<vmem>>, vector<8x256xf32>
    tpu.vector_store %arg5[%c0_5, %c0_6], %10 {strides = array<i32>} : memref<8x256xf32, #tpu.memory_space<vmem>>, vector<8x256xf32>,
    return
  }
  func.func @transform_0(%arg0: i32, %arg1: i32) -> (i32, i32) {
    %c0_i32 = arith.constant 0 : i32
    return %arg0, %arg1 : i32, i32
  }
  func.func @transform_1(%arg0: i32, %arg1: i32) -> (i32, i32) {
    %c0_i32 = arith.constant 0 : i32
    return %arg0, %arg1 : i32, i32
  }
  func.func @transform_2(%arg0: i32, %arg1: i32) -> (i32, i32) {
    %c0_i32 = arith.constant 0 : i32
    %c0_i32_0 = arith.constant 0 : i32
    return %arg0, %c0_i32 : i32, i32
  }
  func.func @transform_3(%arg0: i32, %arg1: i32) -> (i32, i32) {
    %c0_i32 = arith.constant 0 : i32
    return %arg0, %arg1 : i32, i32
  }
}

</mosaic_0001>

<llo_original>
// kernel: tpu_custom_call.1
$region0: #{tpu_custom_call.1}
  #allocation0 [shape = 'u32[]', space=smem, size = 0x4, offset = 0x4, fixed_abs, tag = 'smem constant byte address 0x4 - core index']
  #allocation1 [shape = 'u32[144,128]{1,0:T(1,128)}', space=vmem, size = 0x12000, scoped, tag = 'internal scratch']
  %s0 = inlined_call_operand.hbm [shape: f32[8,256], index: 0, kind: input, shape index: {}]
  %s1 = inlined_call_operand.hbm [shape: f32[8,256], index: 1, kind: input, shape index: {}]
  %s2 = inlined_call_operand.vmem [shape: f32[8,1], index: 2, kind: input, shape index: {}]
  %s3 = inlined_call_operand.hbm [shape: f32[8,256], index: 3, kind: output, shape index: {}]
  %s4 = sld [smem:[#allocation0]]
  $region30: #{tpu_custom_call.1} parent=0
    _
  %s6 = ssub.s32 1, %s4
  %s7 = scalar_select 0, %s6, %s4
  $region1: #{tpu_custom_call.1} parent=0
    #allocation2 [shape = 'u8[8192]{0}', space=vmem, size = 0x2000, scoped, tag = 'input window, operand 0, single buffered']
    #allocation3 [shape = 's32[1]{0}', space=sflag, size = 0x4, scoped, tag = 'scoped memory for tpu_custom_call.1']
    #allocation4 [shape = 's32[1]{0}', space=sflag, size = 0x4, scoped, tag = 'scoped memory for tpu_custom_call.1']
    #allocation5 [shape = 'u8[8192]{0}', space=vmem, size = 0x2000, scoped, tag = 'input window, operand 1, single buffered']
    #allocation6 [shape = 's32[1]{0}', space=sflag, size = 0x4, scoped, tag = 'scoped memory for tpu_custom_call.1']
    #allocation7 [shape = 'u8[8192]{0}', space=vmem, size = 0x2000, scoped, tag = 'output window, operand 0, single buffered']
    %8 = vsyncpa [#allocation3], 0
    %9 = vsyncpa [#allocation6], 0
    %10 = vsyncpa [#allocation4], 0
    // Predicated region
    $region2: #{tpu_custom_call.1} parent=1 // pred_check
      _
    $region3: #{tpu_custom_call.1} parent=1 // pred_check_branch
      %12 = sbr.rel (0) target = $region5
    $region4: #{tpu_custom_call.1} parent=1 // pred_region
      %s14 = ssub.s32 256, 256
      %15 = vsyncadd [#allocation3], %s14
      %s17 = sshll.u32 [#allocation2], 4
      %s18 = int_to_ptr.vmem [resolvable:$true] %s17
      %20 = dma.hbm_to_vmem [thread:$0]  %s0, 256, %s18, [#allocation3]
    $region5: #{tpu_custom_call.1} parent=1 // pred_fallthru
      _
    // Predicated region
    $region6: #{tpu_custom_call.1} parent=1 // pred_check
      _
    $region7: #{tpu_custom_call.1} parent=1 // pred_check_branch
      %22 = sbr.rel (0) target = $region9
    $region8: #{tpu_custom_call.1} parent=1 // pred_region
      %s24 = ssub.s32 256, 256
      %25 = vsyncadd [#allocation6], %s24
      %s27 = sshll.u32 [#allocation5], 4
      %s28 = int_to_ptr.vmem [resolvable:$true] %s27
      %30 = dma.hbm_to_vmem [thread:$0]  %s1, 256, %s28, [#allocation6]
    $region9: #{tpu_custom_call.1} parent=1 // pred_fallthru
      _
    // Predicated region
    $region10: #{tpu_custom_call.1} parent=1 // pred_check
      _
    $region11: #{tpu_custom_call.1} parent=1 // pred_check_branch
      %32 = sbr.rel (0) target = $region13
    $region12: #{tpu_custom_call.1} parent=1 // pred_region
      _
    $region13: #{tpu_custom_call.1} parent=1 // pred_fallthru
      _
    // Predicated region
    $region14: #{tpu_custom_call.1} parent=1 // pred_check
      _
    $region15: #{tpu_custom_call.1} parent=1 // pred_check_branch
      %34 = sbr.rel (0) target = $region17
    $region16: #{tpu_custom_call.1} parent=1 // pred_region
      %35 = dma.done [#allocation3], 256
    $region17: #{tpu_custom_call.1} parent=1 // pred_fallthru
      _
    // Predicated region
    $region18: #{tpu_custom_call.1} parent=1 // pred_check
      _
    $region19: #{tpu_custom_call.1} parent=1 // pred_check_branch
      %37 = sbr.rel (0) target = $region21
    $region20: #{tpu_custom_call.1} parent=1 // pred_region
      %38 = dma.done [#allocation6], 256
    $region21: #{tpu_custom_call.1} parent=1 // pred_fallthru
      _
    %v39 = vld [vmem:[#allocation5] sm:$0xff]
    %v40 = vld [vmem:[#allocation5 + $0x8] sm:$0xff]
    %v41 = vld [vmem:[#allocation2] sm:$0xff]
    %v42 = vld [vmem:[#allocation2 + $0x8] sm:$0xff]
    %v43 = vxor.u32 %v41, 2147483648
    %v44 = vxor.u32 %v42, 2147483648
    %v45 = vmul.f32 %v43, 1.442695
    %v46 = vpow.pop %v45
    %v47 = vmul.f32 %v44, 1.442695
    %v48 = vpow.pop %v47
    %v49 = vadd.f32 %v46, 1.0
    %v50 = vadd.f32 %v48, 1.0
    %v51 = vrcp.pop %v49
    %v52 = vmul.f32 1.0, %v51
    %v53 = vrcp.pop %v50
    %v54 = vmul.f32 1.0, %v53
    %v55 = vmul.f32 %v39, %v52
    %v56 = vmul.f32 %v40, %v54
    %v57 = vld [vmem:[%s2] sm:$0xff]
    %59 = vset.pattern.permute.xlu0 0
    %60 = vperm.xlu0 %59, %v57
    %v61 = vpop.permute.xlu0 %60
    %v63 = vadd.f32 %v55, %v61
    %v64 = vadd.f32 %v56, %v61
    %65 = vst [vmem:[#allocation7] sm:$0xff] %v63
    %66 = vst [vmem:[#allocation7 + $0x8] sm:$0xff] %v64
    // Predicated region
    $region22: #{tpu_custom_call.1} parent=1 // pred_check
      _
    $region23: #{tpu_custom_call.1} parent=1 // pred_check_branch
      %68 = sbr.rel (0) target = $region25
    $region24: #{tpu_custom_call.1} parent=1 // pred_region
      %s70 = ssub.s32 256, 256
      %71 = vsyncadd [#allocation4], %s70
      %s73 = sshll.u32 [#allocation7], 4
      %s74 = int_to_ptr.vmem [resolvable:$true] %s73
      %76 = dma.vmem_to_hbm [thread:$0]  %s74, 256, %s3, [#allocation4]
    $region25: #{tpu_custom_call.1} parent=1 // pred_fallthru
      _
    // Predicated region
    $region26: #{tpu_custom_call.1} parent=1 // pred_check
      _
    $region27: #{tpu_custom_call.1} parent=1 // pred_check_branch
      %78 = sbr.rel (0) target = $region29
    $region28: #{tpu_custom_call.1} parent=1 // pred_region
      %79 = dma.done [#allocation4], 256
    $region29: #{tpu_custom_call.1} parent=1 // pred_fallthru
      _
    %80 = vsyncpa [#allocation3], 1
    %81 = vsyncpa [#allocation6], 1
    %82 = vsyncpa [#allocation4], 1

</llo_original>
